<compile_context>
chip_gen: v7x
topology: tpu7x:2x2x1
jax: 0.10.0
libtpu: 0.0.40
codegen_flags: <defaults>
</compile_context>

<pallas_src>
import jax
import jax.numpy as jnp
from jax import lax
from jax.experimental import pallas as pl
from jax.experimental.pallas import tpu as pltpu

LANE = 128  # vreg lane width


def logreg_kernel(x_ref, w_ref, b_ref, o_ref):
    # x_ref: (TM, D), w_ref: (O_pad, D) (PyTorch layout, no transpose),
    # b_ref: (1, O_pad), o_ref: (TM, O_pad) -- lane-dense store.
    logits = lax.dot_general(
        x_ref[...], w_ref[...],
        dimension_numbers=(((1,), (1,)), ((), ())),   # contract D with D -> (TM, O_pad)
        preferred_element_type=jnp.float32,
    )
    logits = logits + b_ref[...]                      # (TM, O_pad) + (1, O_pad)
    o_ref[...] = jax.nn.sigmoid(logits).astype(o_ref.dtype)


def prepare_params(weight, bias):
    """One-time (init-time) parameter prep.

    Pads the output dim up to a multiple of 128 so kernel stores are lane-dense.
    Keeps the PyTorch (O, D) weight layout -- no transpose, no per-call copies.
    """
    O, D = weight.shape
    o_pad = max(LANE, ((O + LANE - 1) // LANE) * LANE)
    w_p = jnp.zeros((o_pad, D), weight.dtype).at[:O, :].set(weight)
    b_p = jnp.zeros((1, o_pad), bias.dtype).at[0, :O].set(bias)
    return w_p, b_p


def logistic_regression(x, w_padded, b_padded, out_dim):
    """x: (B, D) f32; w_padded: (O_pad, D) f32; b_padded: (1, O_pad) f32."""
    B, D = x.shape
    o_pad = w_padded.shape[0]

    # Batch tile: biggest tile that keeps (8,128) divisibility and fits VMEM easily.
    TM = B if B <= 128 else 128
    grid_m = pl.cdiv(B, TM)

    cost = pl.CostEstimate(
        flops=2 * B * D * o_pad,
        transcendentals=B * o_pad,
        bytes_accessed=4 * (B * D + o_pad * D + B * o_pad),
    )

    out_padded = pl.pallas_call(
        logreg_kernel,
        out_shape=jax.ShapeDtypeStruct((B, o_pad), jnp.float32),
        grid_spec=pltpu.PrefetchScalarGridSpec(
            num_scalar_prefetch=0,
            grid=(grid_m,),
            in_specs=[
                pl.BlockSpec((TM, D), lambda i: (i, 0)),       # x tile, pipelined over batch
                pl.BlockSpec((o_pad, D), lambda i: (0, 0)),    # weight, VMEM-resident
                pl.BlockSpec((1, o_pad), lambda i: (0, 0)),    # bias, VMEM-resident
            ],
            out_specs=pl.BlockSpec((TM, o_pad), lambda i: (i, 0)),
        ),
        compiler_params=pltpu.CompilerParams(
            dimension_semantics=("parallel",),                  # shards across TCs on v7x
        ),
        cost_estimate=cost,
    )(x, w_padded, b_padded)

    return out_padded[:, :out_dim]


if __name__ == "__main__":
    # Small shapes consistent with the module: batch=8, input_dim=32, output_dim=16
    B, D, O = 8, 32, 16

    key = jax.random.PRNGKey(0)
    kx, kw, kb = jax.random.split(key, 3)

    # Deterministic parameter init mimicking torch.nn.Linear defaults:
    # uniform(-1/sqrt(in_features), 1/sqrt(in_features))
    bound = 1.0 / jnp.sqrt(jnp.float32(D))
    weight = jax.random.uniform(kw, (O, D), jnp.float32, -bound, bound)
    bias = jax.random.uniform(kb, (O,), jnp.float32, -bound, bound)
    x = jax.random.normal(kx, (B, D), jnp.float32)

    # Init-time prep (done once, amortized across all forward calls).
    w_padded, b_padded = prepare_params(weight, bias)

    out = logistic_regression(x, w_padded, b_padded, O)
    out = jax.block_until_ready(out)

    # Reference check (plain JAX)
    ref = jax.nn.sigmoid(x @ weight.T + bias)
    assert out.shape == (B, O)
    assert jnp.allclose(out, ref, atol=1e-5, rtol=1e-5)

    print("KERNEL_OK")
</pallas_src>

<mosaic_0001>
module attributes {stable_mosaic.version = 11 : i64} {
  func.func @logreg_kernel(%arg0: i32, %arg1: memref<8x32xf32, #tpu.memory_space<vmem>>, %arg2: memref<128x32xf32, #tpu.memory_space<vmem>>, %arg3: memref<1x128xf32, #tpu.memory_space<vmem>>, %arg4: memref<8x128xf32, #tpu.memory_space<vmem>>) attributes {dimension_semantics = [#tpu.dimension_semantics<parallel>], iteration_bounds = array<i64: 1>, scalar_prefetch = 0 : i64, scratch_operands = 0 : i64, tpu.core_type = #tpu.core_type<tc>, window_params = [{transform_indices = @transform_0, window_bounds = array<i64: 8, 32>}, {pipeline_mode = #tpu.pipeline_mode<synchronous>, transform_indices = @transform_1, window_bounds = array<i64: 128, 32>}, {pipeline_mode = #tpu.pipeline_mode<synchronous>, transform_indices = @transform_2, window_bounds = array<i64: 1, 128>}, {transform_indices = @transform_3, window_bounds = array<i64: 8, 128>}]} {
    %c0 = arith.constant 0 : index
    %c0_0 = arith.constant 0 : index
    %0 = vector.load %arg1[%c0, %c0_0] : memref<8x32xf32, #tpu.memory_space<vmem>>, vector<8x32xf32>
    %c0_1 = arith.constant 0 : index
    %c0_2 = arith.constant 0 : index
    %1 = vector.load %arg2[%c0_1, %c0_2] : memref<128x32xf32, #tpu.memory_space<vmem>>, vector<128x32xf32>
    %cst = arith.constant dense<0.000000e+00> : vector<8x128xf32>
    %2 = tpu.matmul %0, %1, %cst {dimension_numbers = #tpu.dot_dimension_numbers<[1], [1], [0], [0], [0, 0, 1, 0], [], []>} : vector<8x32xf32>, vector<128x32xf32>, vector<8x128xf32> -> vector<8x128xf32>
    %c0_3 = arith.constant 0 : index
    %c0_4 = arith.constant 0 : index
    %3 = vector.load %arg3[%c0_3, %c0_4] : memref<1x128xf32, #tpu.memory_space<vmem>>, vector<1x128xf32>
    %4 = vector.broadcast %3 : vector<1x128xf32> to vector<8x128xf32>
    %5 = arith.addf %2, %4 : vector<8x128xf32>
    %6 = arith.negf %5 : vector<8x128xf32>
    %7 = math.exp %6 : vector<8x128xf32>
    %cst_5 = arith.constant 1.000000e+00 : f32
    %8 = vector.broadcast %cst_5 : f32 to vector<8x128xf32>
    %9 = arith.addf %8, %7 : vector<8x128xf32>
    %10 = arith.divf %8, %9 : vector<8x128xf32>
    %c0_6 = arith.constant 0 : index
    %c0_7 = arith.constant 0 : index
    %11 = vector.load %arg4[%c0_6, %c0_7] : memref<8x128xf32, #tpu.memory_space<vmem>>, vector<8x128xf32>
    tpu.vector_store %arg4[%c0_6, %c0_7], %10 {strides = array<i32>} : memref<8x128xf32, #tpu.memory_space<vmem>>, vector<8x128xf32>,
    return
  }
  func.func @transform_0(%arg0: i32) -> (i32, i32) {
    %c0_i32 = arith.constant 0 : i32
    %c0_i32_0 = arith.constant 0 : i32
    return %arg0, %c0_i32 : i32, i32
  }
  func.func @transform_1(%arg0: i32) -> (i32, i32) {
    %c0_i32 = arith.constant 0 : i32
    %c0_i32_0 = arith.constant 0 : i32
    %c0_i32_1 = arith.constant 0 : i32
    return %c0_i32, %c0_i32_0 : i32, i32
  }
  func.func @transform_2(%arg0: i32) -> (i32, i32) {
    %c0_i32 = arith.constant 0 : i32
    %c0_i32_0 = arith.constant 0 : i32
    %c0_i32_1 = arith.constant 0 : i32
    return %c0_i32, %c0_i32_0 : i32, i32
  }
  func.func @transform_3(%arg0: i32) -> (i32, i32) {
    %c0_i32 = arith.constant 0 : i32
    %c0_i32_0 = arith.constant 0 : i32
    return %arg0, %c0_i32 : i32, i32
  }
}

</mosaic_0001>

<llo_original>
// kernel: tpu_custom_call.1
$region0: #{tpu_custom_call.1}
  #allocation0 [shape = 'u32[]', space=smem, size = 0x4, offset = 0x4, fixed_abs, tag = 'smem constant byte address 0x4 - core index']
  #allocation1 [shape = 'u32[144,128]{1,0:T(1,128)}', space=vmem, size = 0x12000, scoped, tag = 'internal scratch']
  %s0 = inlined_call_operand.vmem [shape: f32[8,32], index: 0, kind: input, shape index: {}]
  %s1 = inlined_call_operand.vmem [shape: f32[128,32], index: 1, kind: input, shape index: {}]
  %s2 = inlined_call_operand.vmem [shape: f32[1,128], index: 2, kind: input, shape index: {}]
  %s3 = inlined_call_operand.hbm [shape: f32[8,128], index: 3, kind: output, shape index: {}]
  %s4 = sld [smem:[#allocation0]]
  $region22: #{tpu_custom_call.1} parent=0
    _
  %s6 = ssub.s32 1, %s4
  %s7 = scalar_select 0, %s6, %s4
  $region1: #{tpu_custom_call.1} parent=0
    #allocation2 [shape = 'u8[4096]{0}', space=vmem, size = 0x1000, scoped, tag = 'output window, operand 0, single buffered']
    #allocation3 [shape = 's32[1]{0}', space=sflag, size = 0x4, scoped, tag = 'scoped memory for tpu_custom_call.1']
    %8 = vsyncpa [#allocation3], 0
    // Predicated region
    $region2: #{tpu_custom_call.1} parent=1 // pred_check
      _
    $region3: #{tpu_custom_call.1} parent=1 // pred_check_branch
      %10 = sbr.rel (0) target = $region5
    $region4: #{tpu_custom_call.1} parent=1 // pred_region
      _
    $region5: #{tpu_custom_call.1} parent=1 // pred_fallthru
      _
    // Predicated region
    $region6: #{tpu_custom_call.1} parent=1 // pred_check
      _
    $region7: #{tpu_custom_call.1} parent=1 // pred_check_branch
      %12 = sbr.rel (0) target = $region9
    $region8: #{tpu_custom_call.1} parent=1 // pred_region
      _
    $region9: #{tpu_custom_call.1} parent=1 // pred_fallthru
      _
    // Predicated region
    $region10: #{tpu_custom_call.1} parent=1 // pred_check
      _
    $region11: #{tpu_custom_call.1} parent=1 // pred_check_branch
      %14 = sbr.rel (0) target = $region13
    $region12: #{tpu_custom_call.1} parent=1 // pred_region
      _
    $region13: #{tpu_custom_call.1} parent=1 // pred_fallthru
      _
    %v15 = vld [vmem:[%s0] sm:$0xff]
    %v16 = vld [vmem:[%s1] sm:$0xff]
    %v17 = vld [vmem:[%s1 + $0x8] sm:$0xff]
    %v18 = vld [vmem:[%s1 + $0x10] sm:$0xff]
    %v19 = vld [vmem:[%s1 + $0x18] sm:$0xff]
    %v20 = vld [vmem:[%s1 + $0x20] sm:$0xff]
    %v21 = vld [vmem:[%s1 + $0x28] sm:$0xff]
    %v22 = vld [vmem:[%s1 + $0x30] sm:$0xff]
    %v23 = vld [vmem:[%s1 + $0x38] sm:$0xff]
    %v24 = vld [vmem:[%s1 + $0x40] sm:$0xff]
    %v25 = vld [vmem:[%s1 + $0x48] sm:$0xff]
    %v26 = vld [vmem:[%s1 + $0x50] sm:$0xff]
    %v27 = vld [vmem:[%s1 + $0x58] sm:$0xff]
    %v28 = vld [vmem:[%s1 + $0x60] sm:$0xff]
    %v29 = vld [vmem:[%s1 + $0x68] sm:$0xff]
    %v30 = vld [vmem:[%s1 + $0x70] sm:$0xff]
    %v31 = vld [vmem:[%s1 + $0x78] sm:$0xff]
    %v32 = vld [vmem:[%s2] sm:$0x1]
    %v34 = vlaneseq
    %v35 = vshrl.u32 %v34, 7
    %v36 = vsub.s32 0, %v35
    %v37 = vrot.slane %v32, %v36
    %vm39 = vcmask 261120
    %v41 = vsel %vm39, %v15, 0
    %v44 = vsel %vm39, %v16, 0
    %v47 = vsel %vm39, %v17, 0
    %v50 = vsel %vm39, %v18, 0
    %v53 = vsel %vm39, %v19, 0
    %v56 = vsel %vm39, %v20, 0
    %v59 = vsel %vm39, %v21, 0
    %v62 = vsel %vm39, %v22, 0
    %v65 = vsel %vm39, %v23, 0
    %v68 = vsel %vm39, %v24, 0
    %v71 = vsel %vm39, %v25, 0
    %v74 = vsel %vm39, %v26, 0
    %v77 = vsel %vm39, %v27, 0
    %v80 = vsel %vm39, %v28, 0
    %v83 = vsel %vm39, %v29, 0
    %v86 = vsel %vm39, %v30, 0
    %v89 = vsel %vm39, %v31, 0
    %91 = vmatprep.subr.mxu0 0.0
    %92 = vmatpush1.xpose.msra.mxu0 %v44
    %93 = vmatprep.subr.mxu0 0.0
    %94 = vmatpush1.xpose.msra.mxu0 %v47
    %95 = vmatprep.subr.mxu0 0.0
    %96 = vmatpush1.xpose.msra.mxu0 %v50
    %97 = vmatprep.subr.mxu0 0.0
    %98 = vmatpush1.xpose.msra.mxu0 %v53
    %99 = vmatprep.subr.mxu0 0.0
    %100 = vmatpush1.xpose.msra.mxu0 %v56
    %101 = vmatprep.subr.mxu0 0.0
    %102 = vmatpush1.xpose.msra.mxu0 %v59
    %103 = vmatprep.subr.mxu0 0.0
    %104 = vmatpush1.xpose.msra.mxu0 %v62
    %105 = vmatprep.subr.mxu0 0.0
    %106 = vmatpush1.xpose.msra.mxu0 %v65
    %107 = vmatprep.subr.mxu0 0.0
    %108 = vmatpush1.xpose.msra.mxu0 %v68
    %109 = vmatprep.subr.mxu0 0.0
    %110 = vmatpush1.xpose.msra.mxu0 %v71
    %111 = vmatprep.subr.mxu0 0.0
    %112 = vmatpush1.xpose.msra.mxu0 %v74
    %113 = vmatprep.subr.mxu0 0.0
    %114 = vmatpush1.xpose.msra.mxu0 %v77
    %115 = vmatprep.subr.mxu0 0.0
    %116 = vmatpush1.xpose.msra.mxu0 %v80
    %117 = vmatprep.subr.mxu0 0.0
    %118 = vmatpush1.xpose.msra.mxu0 %v83
    %119 = vmatprep.subr.mxu0 0.0
    %120 = vmatpush1.xpose.msra.mxu0 %v86
    %121 = vmatprep.subr.mxu0 0.0
    %122 = vmatpush1.xpose.msra.mxu0 %v89
    %123 = vmatprep.subr.mxu0 0.0
    %124 = vmatpush1.xpose.msra.mxu0 0.0
    %125 = vmatprep.subr.mxu0 0.0
    %126 = vmatpush1.xpose.msra.mxu0 0.0
    %127 = vmatprep.subr.mxu0 0.0
    %128 = vmatpush1.xpose.msra.mxu0 0.0
    %129 = vmatprep.subr.mxu0 0.0
    %130 = vmatpush1.xpose.msra.mxu0 0.0
    %131 = vmatprep.subr.mxu0 0.0
    %132 = vmatpush1.xpose.msra.mxu0 0.0
    %133 = vmatprep.subr.mxu0 0.0
    %134 = vmatpush1.xpose.msra.mxu0 0.0
    %135 = vmatprep.subr.mxu0 0.0
    %136 = vmatpush1.xpose.msra.mxu0 0.0
    %137 = vmatprep.subr.mxu0 0.0
    %138 = vmatpush1.xpose.msra.mxu0 0.0
    %139 = vmatprep.subr.mxu0 0.0
    %140 = vmatpush1.xpose.msra.mxu0 0.0
    %141 = vmatprep.subr.mxu0 0.0
    %142 = vmatpush1.xpose.msra.mxu0 0.0
    %143 = vmatprep.subr.mxu0 0.0
    %144 = vmatpush1.xpose.msra.mxu0 0.0
    %145 = vmatprep.subr.mxu0 0.0
    %146 = vmatpush1.xpose.msra.mxu0 0.0
    %147 = vmatprep.subr.mxu0 0.0
    %148 = vmatpush1.xpose.msra.mxu0 0.0
    %149 = vmatprep.subr.mxu0 0.0
    %150 = vmatpush1.xpose.msra.mxu0 0.0
    %151 = vmatprep.subr.mxu0 0.0
    %152 = vmatpush1.xpose.msra.mxu0 0.0
    %153 = vmatprep.subr.mxu0 0.0
    %154 = vmatpush1.xpose.msra.mxu0 0.0
    %155 = vmatprep.mubr.f32.mxu0 0.0
    %156 = vmatmul.mubr.f32.gmra.mrb[0].mxu0 %v41
    %v157 = vpop.f32.mrb[0].mxu0
    %v158 = vadd.f32 %v37, %v157
    %v159 = vpop.f32.mrb[0].mxu0
    %160 = vdwg.mxu0
    %v161 = vxor.u32 %v158, 2147483648
    %v162 = vmul.f32 %v161, 1.442695
    %v163 = vpow.pop %v162
    %v164 = vadd.f32 %v163, 1.0
    %v165 = vrcp.pop %v164
    %v166 = vmul.f32 1.0, %v165
    %167 = vst [vmem:[#allocation2] sm:$0xff] %v166
    // Predicated region
    $region14: #{tpu_custom_call.1} parent=1 // pred_check
      _
    $region15: #{tpu_custom_call.1} parent=1 // pred_check_branch
      %169 = sbr.rel (0) target = $region17
    $region16: #{tpu_custom_call.1} parent=1 // pred_region
      %s171 = ssub.s32 128, 128
      %172 = vsyncadd [#allocation3], %s171
      %s174 = sshll.u32 [#allocation2], 4
      %s175 = int_to_ptr.vmem [resolvable:$true] %s174
      %177 = dma.vmem_to_hbm [thread:$0]  %s175, 128, %s3, [#allocation3]
    $region17: #{tpu_custom_call.1} parent=1 // pred_fallthru
      _
    // Predicated region
    $region18: #{tpu_custom_call.1} parent=1 // pred_check
      _
    $region19: #{tpu_custom_call.1} parent=1 // pred_check_branch
      %179 = sbr.rel (0) target = $region21
    $region20: #{tpu_custom_call.1} parent=1 // pred_region
      %180 = dma.done [#allocation3], 128
    $region21: #{tpu_custom_call.1} parent=1 // pred_fallthru
      _
    %181 = vsyncpa [#allocation3], 1

</llo_original>
